<compile_context>
chip_gen: v7x
topology: tpu7x:2x2x1
jax: 0.10.0
libtpu: 0.0.40
codegen_flags: <defaults>
</compile_context>

<pallas_src>
import functools

import jax
import jax.numpy as jnp
from jax import lax
from jax.experimental import pallas as pl
from jax.experimental.pallas import tpu as pltpu


def _pair(v):
    if isinstance(v, (tuple, list)):
        assert len(v) == 2
        return int(v[0]), int(v[1])
    return int(v), int(v)


def _ds(start, size, stride):
    return pl.ds(start, size) if stride == 1 else pl.ds(start, size, stride)


def _maxpool2d_kernel(x_ref, o_ref, *, kh, kw, dh, dw, dilh, dilw):
    # x_ref block: (Hp, Wp, bc) channels-last; o_ref block: (oH, oW, bc).
    oH, oW, _ = o_ref.shape
    acc = None
    for i in range(kh):          # small static loops -> fully unrolled
        for j in range(kw):
            win = x_ref[_ds(i * dilh, oH, dh), _ds(j * dilw, oW, dw), :]
            acc = win if acc is None else jnp.maximum(acc, win)
    o_ref[...] = acc.astype(o_ref.dtype)


def max_pool2d(x, kernel_size, stride=None, padding=0, dilation=1,
               return_indices=False, ceil_mode=False):
    """MaxPool2d forward. x: (N, C, H, W). Matches torch.nn.MaxPool2d (floor mode)."""
    # TODO(synk): return_indices (for MaxUnpool2d) and ceil_mode are not implemented.
    assert not return_indices, "return_indices not supported"
    assert not ceil_mode, "ceil_mode not supported"

    kh, kw = _pair(kernel_size)
    dh, dw = _pair(stride if stride is not None else kernel_size)
    ph, pw = _pair(padding)
    dilh, dilw = _pair(dilation)

    N, C, H, W = x.shape
    Hp, Wp = H + 2 * ph, W + 2 * pw
    oH = (Hp - dilh * (kh - 1) - 1) // dh + 1
    oW = (Wp - dilw * (kw - 1) - 1) // dw + 1
    assert oH > 0 and oW > 0, "kernel larger than (padded) input"

    NC = N * C
    # Channels-last: (Hp, Wp, NC) puts N*C on the 128-lane axis -> lane-dense I/O.
    xt = jnp.transpose(x.reshape(NC, H, W), (1, 2, 0))
    if ph or pw:
        if jnp.issubdtype(x.dtype, jnp.floating):
            neg = jnp.array(-jnp.inf, dtype=x.dtype)
        else:
            neg = jnp.array(jnp.iinfo(x.dtype).min, dtype=x.dtype)
        xt = jnp.pad(xt, ((ph, ph), (pw, pw), (0, 0)), constant_values=neg)

    # Channel-block size: keep the (input + output) tile around ~4 MiB so the
    # double-buffered pipeline stays under the default scoped-VMEM limit on every
    # generation (tightest on v7x).  Block the lane axis only in multiples of 128.
    itemsize = jnp.dtype(x.dtype).itemsize
    bytes_per_channel = (Hp * Wp + oH * oW) * itemsize
    cap = max(1, (4 * 1024 * 1024) // bytes_per_channel)
    if NC % 128 == 0 and cap >= 128:
        bc = min(NC, (cap // 128) * 128)
        while NC % bc:
            bc -= 128
    else:
        bc = NC  # small channel counts: one lane-block covering the full channel dim
    grid = (NC // bc,)

    kernel = functools.partial(_maxpool2d_kernel, kh=kh, kw=kw, dh=dh, dw=dw,
                               dilh=dilh, dilw=dilw)

    out = pl.pallas_call(
        kernel,
        out_shape=jax.ShapeDtypeStruct((oH, oW, NC), x.dtype),
        grid=grid,
        in_specs=[pl.BlockSpec((Hp, Wp, bc), lambda i: (0, 0, i))],
        out_specs=pl.BlockSpec((oH, oW, bc), lambda i: (0, 0, i)),
        compiler_params=pltpu.CompilerParams(dimension_semantics=("parallel",)),
    )(xt)

    # Layout plumbing back to NCHW happens in XLA, outside the kernel.
    return jnp.transpose(out, (2, 0, 1)).reshape(N, C, oH, oW)


def _reference_max_pool2d(x, kernel_size, stride=None, padding=0, dilation=1):
    kh, kw = _pair(kernel_size)
    dh, dw = _pair(stride if stride is not None else kernel_size)
    ph, pw = _pair(padding)
    dilh, dilw = _pair(dilation)
    return lax.reduce_window(
        x, -jnp.inf, lax.max,
        window_dimensions=(1, 1, kh, kw),
        window_strides=(1, 1, dh, dw),
        padding=((0, 0), (0, 0), (ph, ph), (pw, pw)),
        window_dilation=(1, 1, dilh, dilw),
    )


if __name__ == "__main__":
    key = jax.random.PRNGKey(0)
    # small shapes consistent with the module: batch=2, channels=4, H=W=16
    x = jax.random.normal(key, (2, 4, 16, 16), dtype=jnp.float32)

    # config 1: square window of size 3, stride 2 (docstring example)
    out1 = max_pool2d(x, 3, stride=2)
    jax.block_until_ready(out1)
    ref1 = _reference_max_pool2d(x, 3, stride=2)
    assert out1.shape == (2, 4, 7, 7), out1.shape
    assert jnp.allclose(out1, ref1), "config 1 mismatch"

    # config 2: non-square window (3, 2), stride (2, 1) (docstring example)
    out2 = max_pool2d(x, (3, 2), stride=(2, 1))
    jax.block_until_ready(out2)
    ref2 = _reference_max_pool2d(x, (3, 2), stride=(2, 1))
    assert out2.shape == (2, 4, 7, 15), out2.shape
    assert jnp.allclose(out2, ref2), "config 2 mismatch"

    # config 3: padding
    out3 = max_pool2d(x, 3, stride=2, padding=1)
    jax.block_until_ready(out3)
    ref3 = _reference_max_pool2d(x, 3, stride=2, padding=1)
    assert out3.shape == (2, 4, 8, 8), out3.shape
    assert jnp.allclose(out3, ref3), "config 3 mismatch"

    # config 4: dilation
    out4 = max_pool2d(x, 2, stride=2, dilation=2)
    jax.block_until_ready(out4)
    ref4 = _reference_max_pool2d(x, 2, stride=2, dilation=2)
    assert out4.shape == (2, 4, 7, 7), out4.shape
    assert jnp.allclose(out4, ref4), "config 4 mismatch"

    print("KERNEL_OK")
</pallas_src>

<mosaic_0001>
module attributes {stable_mosaic.version = 11 : i64} {
  func.func @_maxpool2d_kernel(%arg0: i32, %arg1: memref<16x16x8xf32, #tpu.memory_space<vmem>>, %arg2: memref<7x7x8xf32, #tpu.memory_space<vmem>>) attributes {dimension_semantics = [#tpu.dimension_semantics<parallel>], iteration_bounds = array<i64: 1>, scalar_prefetch = 0 : i64, scratch_operands = 0 : i64, tpu.core_type = #tpu.core_type<tc>, window_params = [{transform_indices = @transform_0, window_bounds = array<i64: 16, 16, 8>}, {transform_indices = @transform_1, window_bounds = array<i64: 7, 7, 8>}]} {
    %c0 = arith.constant 0 : index
    %c0_0 = arith.constant 0 : index
    %c0_1 = arith.constant 0 : index
    %0 = tpu.strided_load %arg1[%c0, %c0_0, %c0_1] {strides = array<i32: 2, 2, 1>} : memref<16x16x8xf32, #tpu.memory_space<vmem>>, vector<7x7x8xf32>
    %c0_2 = arith.constant 0 : index
    %c1 = arith.constant 1 : index
    %c0_3 = arith.constant 0 : index
    %1 = tpu.strided_load %arg1[%c0_2, %c1, %c0_3] {strides = array<i32: 2, 2, 1>} : memref<16x16x8xf32, #tpu.memory_space<vmem>>, vector<7x7x8xf32>
    %2 = arith.maximumf %0, %1 : vector<7x7x8xf32>
    %c0_4 = arith.constant 0 : index
    %c2 = arith.constant 2 : index
    %c0_5 = arith.constant 0 : index
    %3 = tpu.strided_load %arg1[%c0_4, %c2, %c0_5] {strides = array<i32: 2, 2, 1>} : memref<16x16x8xf32, #tpu.memory_space<vmem>>, vector<7x7x8xf32>
    %4 = arith.maximumf %2, %3 : vector<7x7x8xf32>
    %c1_6 = arith.constant 1 : index
    %c0_7 = arith.constant 0 : index
    %c0_8 = arith.constant 0 : index
    %5 = tpu.strided_load %arg1[%c1_6, %c0_7, %c0_8] {strides = array<i32: 2, 2, 1>} : memref<16x16x8xf32, #tpu.memory_space<vmem>>, vector<7x7x8xf32>
    %6 = arith.maximumf %4, %5 : vector<7x7x8xf32>
    %c1_9 = arith.constant 1 : index
    %c1_10 = arith.constant 1 : index
    %c0_11 = arith.constant 0 : index
    %7 = tpu.strided_load %arg1[%c1_9, %c1_10, %c0_11] {strides = array<i32: 2, 2, 1>} : memref<16x16x8xf32, #tpu.memory_space<vmem>>, vector<7x7x8xf32>
    %8 = arith.maximumf %6, %7 : vector<7x7x8xf32>
    %c1_12 = arith.constant 1 : index
    %c2_13 = arith.constant 2 : index
    %c0_14 = arith.constant 0 : index
    %9 = tpu.strided_load %arg1[%c1_12, %c2_13, %c0_14] {strides = array<i32: 2, 2, 1>} : memref<16x16x8xf32, #tpu.memory_space<vmem>>, vector<7x7x8xf32>
    %10 = arith.maximumf %8, %9 : vector<7x7x8xf32>
    %c2_15 = arith.constant 2 : index
    %c0_16 = arith.constant 0 : index
    %c0_17 = arith.constant 0 : index
    %11 = tpu.strided_load %arg1[%c2_15, %c0_16, %c0_17] {strides = array<i32: 2, 2, 1>} : memref<16x16x8xf32, #tpu.memory_space<vmem>>, vector<7x7x8xf32>
    %12 = arith.maximumf %10, %11 : vector<7x7x8xf32>
    %c2_18 = arith.constant 2 : index
    %c1_19 = arith.constant 1 : index
    %c0_20 = arith.constant 0 : index
    %13 = tpu.strided_load %arg1[%c2_18, %c1_19, %c0_20] {strides = array<i32: 2, 2, 1>} : memref<16x16x8xf32, #tpu.memory_space<vmem>>, vector<7x7x8xf32>
    %14 = arith.maximumf %12, %13 : vector<7x7x8xf32>
    %c2_21 = arith.constant 2 : index
    %c2_22 = arith.constant 2 : index
    %c0_23 = arith.constant 0 : index
    %15 = tpu.strided_load %arg1[%c2_21, %c2_22, %c0_23] {strides = array<i32: 2, 2, 1>} : memref<16x16x8xf32, #tpu.memory_space<vmem>>, vector<7x7x8xf32>
    %16 = arith.maximumf %14, %15 : vector<7x7x8xf32>
    %c0_24 = arith.constant 0 : index
    %c0_25 = arith.constant 0 : index
    %c0_26 = arith.constant 0 : index
    %17 = vector.load %arg2[%c0_24, %c0_25, %c0_26] : memref<7x7x8xf32, #tpu.memory_space<vmem>>, vector<7x7x8xf32>
    tpu.vector_store %arg2[%c0_24, %c0_25, %c0_26], %16 {strides = array<i32>} : memref<7x7x8xf32, #tpu.memory_space<vmem>>, vector<7x7x8xf32>,
    return
  }
  func.func @transform_0(%arg0: i32) -> (i32, i32, i32) {
    %c0_i32 = arith.constant 0 : i32
    %c0_i32_0 = arith.constant 0 : i32
    %c0_i32_1 = arith.constant 0 : i32
    return %c0_i32, %c0_i32_0, %arg0 : i32, i32, i32
  }
  func.func @transform_1(%arg0: i32) -> (i32, i32, i32) {
    %c0_i32 = arith.constant 0 : i32
    %c0_i32_0 = arith.constant 0 : i32
    %c0_i32_1 = arith.constant 0 : i32
    return %c0_i32, %c0_i32_0, %arg0 : i32, i32, i32
  }
}

</mosaic_0001>

<llo_original>
// kernel: tpu_custom_call.1
$region0: #{tpu_custom_call.1}
  #allocation0 [shape = 'u32[]', space=smem, size = 0x4, offset = 0x4, fixed_abs, tag = 'smem constant byte address 0x4 - core index']
  #allocation1 [shape = 'u32[144,128]{1,0:T(1,128)}', space=vmem, size = 0x12000, scoped, tag = 'internal scratch']
  %s0 = inlined_call_operand.vmem [shape: f32[16,16,8], index: 0, kind: input, shape index: {}]
  %s1 = inlined_call_operand.hbm [shape: f32[7,7,8], index: 1, kind: output, shape index: {}]
  %s2 = sld [smem:[#allocation0]]
  $region14: #{tpu_custom_call.1} parent=0
    _
  %s4 = ssub.s32 1, %s2
  %s5 = scalar_select 0, %s4, %s2
  $region1: #{tpu_custom_call.1} parent=0
    #allocation2 [shape = 'u8[28672]{0}', space=vmem, size = 0x7000, scoped, tag = 'output window, operand 0, single buffered']
    #allocation3 [shape = 's32[1]{0}', space=sflag, size = 0x4, scoped, tag = 'scoped memory for tpu_custom_call.1']
    %6 = vsyncpa [#allocation3], 0
    // Predicated region
    $region2: #{tpu_custom_call.1} parent=1 // pred_check
      _
    $region3: #{tpu_custom_call.1} parent=1 // pred_check_branch
      %8 = sbr.rel (0) target = $region5
    $region4: #{tpu_custom_call.1} parent=1 // pred_region
      _
    $region5: #{tpu_custom_call.1} parent=1 // pred_fallthru
      _
    %v9 = vld [vmem:[%s0] ss:$2 sm:$0x7f]
    %s10 = scalar_lea.vmem %s0, 32
    %v11 = vld [vmem:[%s10] ss:$2 sm:$0x7f]
    %s12 = scalar_lea.vmem %s0, 64
    %v13 = vld [vmem:[%s12] ss:$2 sm:$0x7f]
    %s14 = scalar_lea.vmem %s0, 96
    %v15 = vld [vmem:[%s14] ss:$2 sm:$0x7f]
    %s16 = scalar_lea.vmem %s0, 128
    %v17 = vld [vmem:[%s16] ss:$2 sm:$0x7f]
    %s18 = scalar_lea.vmem %s0, 160
    %v19 = vld [vmem:[%s18] ss:$2 sm:$0x7f]
    %s20 = scalar_lea.vmem %s0, 192
    %v21 = vld [vmem:[%s20] ss:$2 sm:$0x7f]
    %s22 = scalar_lea.vmem %s0, 1
    %v23 = vld [vmem:[%s22] ss:$2 sm:$0x7f]
    %s24 = scalar_lea.vmem %s0, 33
    %v25 = vld [vmem:[%s24] ss:$2 sm:$0x7f]
    %s26 = scalar_lea.vmem %s0, 65
    %v27 = vld [vmem:[%s26] ss:$2 sm:$0x7f]
    %s28 = scalar_lea.vmem %s0, 97
    %v29 = vld [vmem:[%s28] ss:$2 sm:$0x7f]
    %s30 = scalar_lea.vmem %s0, 129
    %v31 = vld [vmem:[%s30] ss:$2 sm:$0x7f]
    %s32 = scalar_lea.vmem %s0, 161
    %v33 = vld [vmem:[%s32] ss:$2 sm:$0x7f]
    %s34 = scalar_lea.vmem %s0, 193
    %v35 = vld [vmem:[%s34] ss:$2 sm:$0x7f]
    %v36 = vmax.f32 %v9, %v23
    %v37 = vmax.f32 %v11, %v25
    %v38 = vmax.f32 %v13, %v27
    %v39 = vmax.f32 %v15, %v29
    %v40 = vmax.f32 %v17, %v31
    %v41 = vmax.f32 %v19, %v33
    %v42 = vmax.f32 %v21, %v35
    %s43 = scalar_lea.vmem %s0, 2
    %v44 = vld [vmem:[%s43] ss:$2 sm:$0x7f]
    %s45 = scalar_lea.vmem %s0, 34
    %v46 = vld [vmem:[%s45] ss:$2 sm:$0x7f]
    %s47 = scalar_lea.vmem %s0, 66
    %v48 = vld [vmem:[%s47] ss:$2 sm:$0x7f]
    %s49 = scalar_lea.vmem %s0, 98
    %v50 = vld [vmem:[%s49] ss:$2 sm:$0x7f]
    %s51 = scalar_lea.vmem %s0, 130
    %v52 = vld [vmem:[%s51] ss:$2 sm:$0x7f]
    %s53 = scalar_lea.vmem %s0, 162
    %v54 = vld [vmem:[%s53] ss:$2 sm:$0x7f]
    %s55 = scalar_lea.vmem %s0, 194
    %v56 = vld [vmem:[%s55] ss:$2 sm:$0x7f]
    %v57 = vmax.f32 %v36, %v44
    %v58 = vmax.f32 %v37, %v46
    %v59 = vmax.f32 %v38, %v48
    %v60 = vmax.f32 %v39, %v50
    %v61 = vmax.f32 %v40, %v52
    %v62 = vmax.f32 %v41, %v54
    %v63 = vmax.f32 %v42, %v56
    %s64 = scalar_lea.vmem %s0, 16
    %v65 = vld [vmem:[%s64] ss:$2 sm:$0x7f]
    %s66 = scalar_lea.vmem %s64, 32
    %v67 = vld [vmem:[%s66] ss:$2 sm:$0x7f]
    %s68 = scalar_lea.vmem %s64, 64
    %v69 = vld [vmem:[%s68] ss:$2 sm:$0x7f]
    %s70 = scalar_lea.vmem %s64, 96
    %v71 = vld [vmem:[%s70] ss:$2 sm:$0x7f]
    %s72 = scalar_lea.vmem %s64, 128
    %v73 = vld [vmem:[%s72] ss:$2 sm:$0x7f]
    %s74 = scalar_lea.vmem %s64, 160
    %v75 = vld [vmem:[%s74] ss:$2 sm:$0x7f]
    %s76 = scalar_lea.vmem %s64, 192
    %v77 = vld [vmem:[%s76] ss:$2 sm:$0x7f]
    %v78 = vmax.f32 %v57, %v65
    %v79 = vmax.f32 %v58, %v67
    %v80 = vmax.f32 %v59, %v69
    %v81 = vmax.f32 %v60, %v71
    %v82 = vmax.f32 %v61, %v73
    %v83 = vmax.f32 %v62, %v75
    %v84 = vmax.f32 %v63, %v77
    %s85 = scalar_lea.vmem %s64, 1
    %v86 = vld [vmem:[%s85] ss:$2 sm:$0x7f]
    %s87 = scalar_lea.vmem %s64, 33
    %v88 = vld [vmem:[%s87] ss:$2 sm:$0x7f]
    %s89 = scalar_lea.vmem %s64, 65
    %v90 = vld [vmem:[%s89] ss:$2 sm:$0x7f]
    %s91 = scalar_lea.vmem %s64, 97
    %v92 = vld [vmem:[%s91] ss:$2 sm:$0x7f]
    %s93 = scalar_lea.vmem %s64, 129
    %v94 = vld [vmem:[%s93] ss:$2 sm:$0x7f]
    %s95 = scalar_lea.vmem %s64, 161
    %v96 = vld [vmem:[%s95] ss:$2 sm:$0x7f]
    %s97 = scalar_lea.vmem %s64, 193
    %v98 = vld [vmem:[%s97] ss:$2 sm:$0x7f]
    %v99 = vmax.f32 %v78, %v86
    %v100 = vmax.f32 %v79, %v88
    %v101 = vmax.f32 %v80, %v90
    %v102 = vmax.f32 %v81, %v92
    %v103 = vmax.f32 %v82, %v94
    %v104 = vmax.f32 %v83, %v96
    %v105 = vmax.f32 %v84, %v98
    %s106 = scalar_lea.vmem %s64, 2
    %v107 = vld [vmem:[%s106] ss:$2 sm:$0x7f]
    %s108 = scalar_lea.vmem %s64, 34
    %v109 = vld [vmem:[%s108] ss:$2 sm:$0x7f]
    %s110 = scalar_lea.vmem %s64, 66
    %v111 = vld [vmem:[%s110] ss:$2 sm:$0x7f]
    %s112 = scalar_lea.vmem %s64, 98
    %v113 = vld [vmem:[%s112] ss:$2 sm:$0x7f]
    %s114 = scalar_lea.vmem %s64, 130
    %v115 = vld [vmem:[%s114] ss:$2 sm:$0x7f]
    %s116 = scalar_lea.vmem %s64, 162
    %v117 = vld [vmem:[%s116] ss:$2 sm:$0x7f]
    %s118 = scalar_lea.vmem %s64, 194
    %v119 = vld [vmem:[%s118] ss:$2 sm:$0x7f]
    %v120 = vmax.f32 %v99, %v107
    %v121 = vmax.f32 %v100, %v109
    %v122 = vmax.f32 %v101, %v111
    %v123 = vmax.f32 %v102, %v113
    %v124 = vmax.f32 %v103, %v115
    %v125 = vmax.f32 %v104, %v117
    %v126 = vmax.f32 %v105, %v119
    %s127 = scalar_lea.vmem %s0, 32
    %v128 = vld [vmem:[%s127] ss:$2 sm:$0x7f]
    %s129 = scalar_lea.vmem %s127, 32
    %v130 = vld [vmem:[%s129] ss:$2 sm:$0x7f]
    %s131 = scalar_lea.vmem %s127, 64
    %v132 = vld [vmem:[%s131] ss:$2 sm:$0x7f]
    %s133 = scalar_lea.vmem %s127, 96
    %v134 = vld [vmem:[%s133] ss:$2 sm:$0x7f]
    %s135 = scalar_lea.vmem %s127, 128
    %v136 = vld [vmem:[%s135] ss:$2 sm:$0x7f]
    %s137 = scalar_lea.vmem %s127, 160
    %v138 = vld [vmem:[%s137] ss:$2 sm:$0x7f]
    %s139 = scalar_lea.vmem %s127, 192
    %v140 = vld [vmem:[%s139] ss:$2 sm:$0x7f]
    %v141 = vmax.f32 %v120, %v128
    %v142 = vmax.f32 %v121, %v130
    %v143 = vmax.f32 %v122, %v132
    %v144 = vmax.f32 %v123, %v134
    %v145 = vmax.f32 %v124, %v136
    %v146 = vmax.f32 %v125, %v138
    %v147 = vmax.f32 %v126, %v140
    %s148 = scalar_lea.vmem %s127, 1
    %v149 = vld [vmem:[%s148] ss:$2 sm:$0x7f]
    %s150 = scalar_lea.vmem %s127, 33
    %v151 = vld [vmem:[%s150] ss:$2 sm:$0x7f]
    %s152 = scalar_lea.vmem %s127, 65
    %v153 = vld [vmem:[%s152] ss:$2 sm:$0x7f]
    %s154 = scalar_lea.vmem %s127, 97
    %v155 = vld [vmem:[%s154] ss:$2 sm:$0x7f]
    %s156 = scalar_lea.vmem %s127, 129
    %v157 = vld [vmem:[%s156] ss:$2 sm:$0x7f]
    %s158 = scalar_lea.vmem %s127, 161
    %v159 = vld [vmem:[%s158] ss:$2 sm:$0x7f]
    %s160 = scalar_lea.vmem %s127, 193
    %v161 = vld [vmem:[%s160] ss:$2 sm:$0x7f]
    %v162 = vmax.f32 %v141, %v149
    %v163 = vmax.f32 %v142, %v151
    %v164 = vmax.f32 %v143, %v153
    %v165 = vmax.f32 %v144, %v155
    %v166 = vmax.f32 %v145, %v157
    %v167 = vmax.f32 %v146, %v159
    %v168 = vmax.f32 %v147, %v161
    %s169 = scalar_lea.vmem %s127, 2
    %v170 = vld [vmem:[%s169] ss:$2 sm:$0x7f]
    %s171 = scalar_lea.vmem %s127, 34
    %v172 = vld [vmem:[%s171] ss:$2 sm:$0x7f]
    %s173 = scalar_lea.vmem %s127, 66
    %v174 = vld [vmem:[%s173] ss:$2 sm:$0x7f]
    %s175 = scalar_lea.vmem %s127, 98
    %v176 = vld [vmem:[%s175] ss:$2 sm:$0x7f]
    %s177 = scalar_lea.vmem %s127, 130
    %v178 = vld [vmem:[%s177] ss:$2 sm:$0x7f]
    %s179 = scalar_lea.vmem %s127, 162
    %v180 = vld [vmem:[%s179] ss:$2 sm:$0x7f]
    %s181 = scalar_lea.vmem %s127, 194
    %v182 = vld [vmem:[%s181] ss:$2 sm:$0x7f]
    %v183 = vmax.f32 %v162, %v170
    %v184 = vmax.f32 %v163, %v172
    %v185 = vmax.f32 %v164, %v174
    %v186 = vmax.f32 %v165, %v176
    %v187 = vmax.f32 %v166, %v178
    %v188 = vmax.f32 %v167, %v180
    %v189 = vmax.f32 %v168, %v182
    %vm190 = vcmask 63488
    %191 = vst.msk [vmem:[#allocation2] sm:$0x7f] %vm190, %v183
    %192 = vst.msk [vmem:[#allocation2 + $0x8] sm:$0x7f] %vm190, %v184
    %193 = vst.msk [vmem:[#allocation2 + $0x10] sm:$0x7f] %vm190, %v185
    %194 = vst.msk [vmem:[#allocation2 + $0x18] sm:$0x7f] %vm190, %v186
    %195 = vst.msk [vmem:[#allocation2 + $0x20] sm:$0x7f] %vm190, %v187
    %196 = vst.msk [vmem:[#allocation2 + $0x28] sm:$0x7f] %vm190, %v188
    %197 = vst.msk [vmem:[#allocation2 + $0x30] sm:$0x7f] %vm190, %v189
    // Predicated region
    $region6: #{tpu_custom_call.1} parent=1 // pred_check
      _
    $region7: #{tpu_custom_call.1} parent=1 // pred_check_branch
      %199 = sbr.rel (0) target = $region9
    $region8: #{tpu_custom_call.1} parent=1 // pred_region
      %s201 = ssub.s32 896, 896
      %202 = vsyncadd [#allocation3], %s201
      %s203 = sshll.u32 [#allocation2], 4
      %s204 = int_to_ptr.vmem [resolvable:$true] %s203
      %209 = dma.vmem_to_hbm [thread:$0]  %s204, 896, %s1, [#allocation3], 128, 128, 8
    $region9: #{tpu_custom_call.1} parent=1 // pred_fallthru
      _
    // Predicated region
    $region10: #{tpu_custom_call.1} parent=1 // pred_check
      _
    $region11: #{tpu_custom_call.1} parent=1 // pred_check_branch
      %211 = sbr.rel (0) target = $region13
    $region12: #{tpu_custom_call.1} parent=1 // pred_region
      %212 = dma.done [#allocation3], 896
    $region13: #{tpu_custom_call.1} parent=1 // pred_fallthru
      _
    %213 = vsyncpa [#allocation3], 1

</llo_original>
